<compile_context>
chip_gen: v6e
topology: v6e:2x2x1
jax: 0.10.0
libtpu: 0.0.40
codegen_flags: <defaults>
</compile_context>

<pallas_src>
import jax
import jax.numpy as jnp
import numpy as np
from jax.experimental import pallas as pl
from jax.experimental.pallas import tpu as pltpu


def _round_up(a, m):
    return ((a + m - 1) // m) * m


def _keep_mask(rnd_block, col, row, *, gamma, W, block_size):
    """Keep-mask (1=keep, 0=drop), float32, for a (TNC, H*W) noise block.

    Each row of `rnd_block` is one (n, c) slice with its (H, W) plane flattened
    row-major onto the lane axis.  The stride-1 max-pool with padding
    block_size // 2 is done separably (W pass, then H pass) with lane
    rotations.  Neighbours that fall outside the (H, W) plane (row crossings /
    wrap-around of the flattened axis) are detected by rotating the col / row
    coordinate maps alongside the data (independent of the rotation direction
    convention) and replaced by 0 -- equivalent to -inf padding because the
    seed matrix is in {0, 1} and every window contains its in-bounds centre.
    """
    pad = block_size // 2
    hw = rnd_block.shape[-1]
    matrix = (rnd_block < gamma).astype(jnp.float32)  # Bernoulli(gamma) seeds

    def pool_1d(v, coord, lane_step):
        out = v
        for d in range(1, pad + 1):
            for shift in (d * lane_step, hw - d * lane_step):
                rv = pltpu.roll(v, shift=shift, axis=1)
                rc = pltpu.roll(coord, shift=shift, axis=1)
                # valid neighbour <=> spatial coordinate moved by exactly d
                valid = jnp.abs(rc - coord) == float(d)
                out = jnp.maximum(out, jnp.where(valid, rv, 0.0))
        return out

    row_max = pool_1d(matrix, col, 1)   # max over the W axis (lane stride 1)
    pooled = pool_1d(row_max, row, W)   # max over the H axis (lane stride W)
    return 1.0 - pooled


def _make_sum_kernel(gamma, W, block_size):
    def sum_kernel(col_ref, row_ref, rnd_ref, psum_ref):
        mask = _keep_mask(rnd_ref[...], col_ref[...], row_ref[...],
                          gamma=gamma, W=W, block_size=block_size)
        psum_ref[...] = jnp.full(psum_ref.shape, jnp.sum(mask), dtype=jnp.float32)
    return sum_kernel


def _make_apply_kernel(gamma, W, block_size):
    def apply_kernel(scale_ref, col_ref, row_ref, rnd_ref, x_ref, y_ref):
        mask = _keep_mask(rnd_ref[...], col_ref[...], row_ref[...],
                          gamma=gamma, W=W, block_size=block_size)
        y = x_ref[...].astype(jnp.float32) * mask * scale_ref[0, 0]
        y_ref[...] = y.astype(y_ref.dtype)
    return apply_kernel


def drop_block(x, rnd, *, block_size, keep_prob, training=True):
    """DropBlock forward, NCHW layout. `rnd` ~ U(0,1) with the same shape as x."""
    if (not training) or keep_prob == 1:
        return x
    # TODO(synk): even block_size in PyTorch changes the pooled spatial shape
    # (H+1) and breaks the elementwise multiply; only odd sizes supported.
    assert block_size % 2 == 1, "only odd block_size matches PyTorch shapes"

    N, C, H, W = x.shape
    assert H >= block_size and W >= block_size
    HW = H * W
    gamma = (1.0 - keep_prob) / (block_size ** 2)
    for s in (H, W):
        gamma *= s / (s - block_size + 1)
    gamma = float(gamma)

    NC = N * C
    # Lane-dense 2-D view (pure reshape, no data movement).
    x2 = x.reshape(NC, HW)
    rnd2 = rnd.reshape(NC, HW)

    # Rows per block: target ~1 MiB per input buffer (safe with 2x double
    # buffering x 3 arrays on every generation incl. v7x's 64 MiB VMEM),
    # multiple of 8 sublanes.
    # TODO(synk): spatial planes larger than ~256K elements would need lane
    # tiling with halos; FPN feature maps are far below that.
    tnc = (1 << 20) // (HW * 4)
    tnc = max(8, min(1024, (tnc // 8) * 8))
    tnc = min(tnc, _round_up(NC, 8))
    nc_pad = _round_up(NC, tnc)
    if nc_pad != NC:
        # Padded rows use rnd = 0 -> seed = 1 -> mask = 0: they contribute
        # nothing to the mask sum and produce y = 0 (sliced off below).
        rnd2 = jnp.pad(rnd2, ((0, nc_pad - NC), (0, 0)))
        x2 = jnp.pad(x2, ((0, nc_pad - NC), (0, 0)))
    grid = nc_pad // tnc

    # Per-lane spatial coordinates of the flattened (H, W) plane.
    lane = jnp.arange(HW, dtype=jnp.int32)
    col2 = (lane % W).astype(jnp.float32).reshape(1, HW)
    row2 = (lane // W).astype(jnp.float32).reshape(1, HW)

    coord_spec = pl.BlockSpec((1, HW), lambda i: (0, 0))
    data_spec = pl.BlockSpec((tnc, HW), lambda i: (i, 0))

    # Pass 1: per-block partial sums of the keep-mask (no accumulator ->
    # "parallel" grid axis).
    psums = pl.pallas_call(
        _make_sum_kernel(gamma, W, block_size),
        out_shape=jax.ShapeDtypeStruct((grid, 8, 128), jnp.float32),
        grid=(grid,),
        in_specs=[coord_spec, coord_spec, data_spec],
        out_specs=pl.BlockSpec((1, 8, 128), lambda i: (i, 0, 0)),
        compiler_params=pltpu.CompilerParams(
            dimension_semantics=("parallel",)),
    )(col2, row2, rnd2)

    mask_sum = jnp.sum(psums[:, 0, 0])
    numel = jnp.float32(NC * HW)
    # Guard against an all-dropped mask (PyTorch would produce inf here).
    scale = jnp.where(mask_sum > 0, numel / jnp.maximum(mask_sum, 1.0), 0.0)
    scale = scale.astype(jnp.float32).reshape(1, 1)

    # Pass 2: recompute the mask from the same noise (no mask intermediate in
    # HBM) and apply it together with the global scale.
    y2 = pl.pallas_call(
        _make_apply_kernel(gamma, W, block_size),
        out_shape=jax.ShapeDtypeStruct((nc_pad, HW), x.dtype),
        grid=(grid,),
        in_specs=[pl.BlockSpec(memory_space=pltpu.MemorySpace.SMEM),
                  coord_spec, coord_spec, data_spec, data_spec],
        out_specs=data_spec,
        compiler_params=pltpu.CompilerParams(
            dimension_semantics=("parallel",)),
    )(scale, col2, row2, rnd2, x2)

    if nc_pad != NC:
        y2 = y2[:NC]
    return y2.reshape(N, C, H, W)


def drop_block_ref(x, rnd, block_size, keep_prob):
    """Pure-JAX reference mirroring the PyTorch forward (same `rnd` noise)."""
    N, C, H, W = x.shape
    gamma = (1.0 - keep_prob) / (block_size ** 2)
    for s in (H, W):
        gamma *= s / (s - block_size + 1)
    matrix = (rnd < gamma).astype(x.dtype)
    p = block_size // 2
    mask_inv = jax.lax.reduce_window(
        matrix, -jnp.inf, jax.lax.max,
        window_dimensions=(1, 1, block_size, block_size),
        window_strides=(1, 1, 1, 1),
        padding=((0, 0), (0, 0), (p, p), (p, p)))
    mask = 1.0 - mask_inv
    return x * mask * (mask.size / jnp.sum(mask))


if __name__ == "__main__":
    key = jax.random.PRNGKey(0)
    kx, kr = jax.random.split(key)
    N, C, H, W = 2, 4, 16, 16
    block_size, keep_prob = 3, 0.9

    x = jax.random.normal(kx, (N, C, H, W), dtype=jnp.float32)
    rnd = jax.random.uniform(kr, (N, C, H, W), dtype=jnp.float32)

    y = drop_block(x, rnd, block_size=block_size, keep_prob=keep_prob,
                   training=True)
    y = jax.block_until_ready(y)

    y_ref = drop_block_ref(x, rnd, block_size, keep_prob)
    np.testing.assert_allclose(np.asarray(y), np.asarray(y_ref),
                               rtol=1e-5, atol=1e-5)

    # eval mode is the identity
    y_eval = drop_block(x, rnd, block_size=block_size, keep_prob=keep_prob,
                        training=False)
    np.testing.assert_allclose(np.asarray(y_eval), np.asarray(x))

    print("KERNEL_OK")
</pallas_src>

<mosaic_0001>
module attributes {stable_mosaic.version = 11 : i64} {
  func.func @sum_kernel(%arg0: i32, %arg1: memref<1x256xf32, #tpu.memory_space<vmem>>, %arg2: memref<1x256xf32, #tpu.memory_space<vmem>>, %arg3: memref<8x256xf32, #tpu.memory_space<vmem>>, %arg4: memref<1x8x128xf32, #tpu.memory_space<vmem>>) attributes {dimension_semantics = [#tpu.dimension_semantics<parallel>], iteration_bounds = array<i64: 1>, scalar_prefetch = 0 : i64, scratch_operands = 0 : i64, tpu.core_type = #tpu.core_type<tc>, window_params = [{pipeline_mode = #tpu.pipeline_mode<synchronous>, transform_indices = @transform_0, window_bounds = array<i64: 1, 256>}, {pipeline_mode = #tpu.pipeline_mode<synchronous>, transform_indices = @transform_1, window_bounds = array<i64: 1, 256>}, {transform_indices = @transform_2, window_bounds = array<i64: 8, 256>}, {transform_indices = @transform_3, window_bounds = array<i64: 1, 8, 128>}]} {
    %c0 = arith.constant 0 : index
    %c0_0 = arith.constant 0 : index
    %0 = vector.load %arg3[%c0, %c0_0] : memref<8x256xf32, #tpu.memory_space<vmem>>, vector<8x256xf32>
    %c0_1 = arith.constant 0 : index
    %c0_2 = arith.constant 0 : index
    %1 = vector.load %arg1[%c0_1, %c0_2] : memref<1x256xf32, #tpu.memory_space<vmem>>, vector<1x256xf32>
    %c0_3 = arith.constant 0 : index
    %c0_4 = arith.constant 0 : index
    %2 = vector.load %arg2[%c0_3, %c0_4] : memref<1x256xf32, #tpu.memory_space<vmem>>, vector<1x256xf32>
    %cst = arith.constant 0.0145124719 : f32
    %3 = vector.broadcast %cst : f32 to vector<8x256xf32>
    %4 = arith.cmpf olt, %0, %3 : vector<8x256xf32>
    %5 = arith.extui %4 : vector<8x256xi1> to vector<8x256xi32>
    %6 = arith.sitofp %5 : vector<8x256xi32> to vector<8x256xf32>
    %c1_i32 = arith.constant 1 : i32
    %7 = tpu.dynamic_rotate %6 by %c1_i32 dim 1 : vector<8x256xf32>, i32 -> vector<8x256xf32>
    %c1_i32_5 = arith.constant 1 : i32
    %8 = tpu.dynamic_rotate %1 by %c1_i32_5 dim 1 : vector<1x256xf32>, i32 -> vector<1x256xf32>
    %9 = arith.subf %8, %1 : vector<1x256xf32>
    %10 = math.absf %9 : vector<1x256xf32>
    %cst_6 = arith.constant 1.000000e+00 : f32
    %11 = vector.broadcast %cst_6 : f32 to vector<1x256xf32>
    %12 = arith.cmpf oeq, %10, %11 : vector<1x256xf32>
    %cst_7 = arith.constant 0.000000e+00 : f32
    %13 = vector.shape_cast %12 : vector<1x256xi1> to vector<1x256xi1>
    %14 = vector.broadcast %13 : vector<1x256xi1> to vector<8x256xi1>
    %15 = vector.broadcast %cst_7 : f32 to vector<8x256xf32>
    %16 = arith.select %14, %7, %15 : vector<8x256xi1>, vector<8x256xf32>
    %17 = arith.maximumf %6, %16 : vector<8x256xf32>
    %c255_i32 = arith.constant 255 : i32
    %18 = tpu.dynamic_rotate %6 by %c255_i32 dim 1 : vector<8x256xf32>, i32 -> vector<8x256xf32>
    %c255_i32_8 = arith.constant 255 : i32
    %19 = tpu.dynamic_rotate %1 by %c255_i32_8 dim 1 : vector<1x256xf32>, i32 -> vector<1x256xf32>
    %20 = arith.subf %19, %1 : vector<1x256xf32>
    %21 = math.absf %20 : vector<1x256xf32>
    %cst_9 = arith.constant 1.000000e+00 : f32
    %22 = vector.broadcast %cst_9 : f32 to vector<1x256xf32>
    %23 = arith.cmpf oeq, %21, %22 : vector<1x256xf32>
    %cst_10 = arith.constant 0.000000e+00 : f32
    %24 = vector.shape_cast %23 : vector<1x256xi1> to vector<1x256xi1>
    %25 = vector.broadcast %24 : vector<1x256xi1> to vector<8x256xi1>
    %26 = vector.broadcast %cst_10 : f32 to vector<8x256xf32>
    %27 = arith.select %25, %18, %26 : vector<8x256xi1>, vector<8x256xf32>
    %28 = arith.maximumf %17, %27 : vector<8x256xf32>
    %c16_i32 = arith.constant 16 : i32
    %29 = tpu.dynamic_rotate %28 by %c16_i32 dim 1 : vector<8x256xf32>, i32 -> vector<8x256xf32>
    %c16_i32_11 = arith.constant 16 : i32
    %30 = tpu.dynamic_rotate %2 by %c16_i32_11 dim 1 : vector<1x256xf32>, i32 -> vector<1x256xf32>
    %31 = arith.subf %30, %2 : vector<1x256xf32>
    %32 = math.absf %31 : vector<1x256xf32>
    %cst_12 = arith.constant 1.000000e+00 : f32
    %33 = vector.broadcast %cst_12 : f32 to vector<1x256xf32>
    %34 = arith.cmpf oeq, %32, %33 : vector<1x256xf32>
    %cst_13 = arith.constant 0.000000e+00 : f32
    %35 = vector.shape_cast %34 : vector<1x256xi1> to vector<1x256xi1>
    %36 = vector.broadcast %35 : vector<1x256xi1> to vector<8x256xi1>
    %37 = vector.broadcast %cst_13 : f32 to vector<8x256xf32>
    %38 = arith.select %36, %29, %37 : vector<8x256xi1>, vector<8x256xf32>
    %39 = arith.maximumf %28, %38 : vector<8x256xf32>
    %c240_i32 = arith.constant 240 : i32
    %40 = tpu.dynamic_rotate %28 by %c240_i32 dim 1 : vector<8x256xf32>, i32 -> vector<8x256xf32>
    %c240_i32_14 = arith.constant 240 : i32
    %41 = tpu.dynamic_rotate %2 by %c240_i32_14 dim 1 : vector<1x256xf32>, i32 -> vector<1x256xf32>
    %42 = arith.subf %41, %2 : vector<1x256xf32>
    %43 = math.absf %42 : vector<1x256xf32>
    %cst_15 = arith.constant 1.000000e+00 : f32
    %44 = vector.broadcast %cst_15 : f32 to vector<1x256xf32>
    %45 = arith.cmpf oeq, %43, %44 : vector<1x256xf32>
    %cst_16 = arith.constant 0.000000e+00 : f32
    %46 = vector.shape_cast %45 : vector<1x256xi1> to vector<1x256xi1>
    %47 = vector.broadcast %46 : vector<1x256xi1> to vector<8x256xi1>
    %48 = vector.broadcast %cst_16 : f32 to vector<8x256xf32>
    %49 = arith.select %47, %40, %48 : vector<8x256xi1>, vector<8x256xf32>
    %50 = arith.maximumf %39, %49 : vector<8x256xf32>
    %cst_17 = arith.constant 1.000000e+00 : f32
    %51 = vector.broadcast %cst_17 : f32 to vector<8x256xf32>
    %52 = arith.subf %51, %50 : vector<8x256xf32>
    %53 = vector.shape_cast %52 : vector<8x256xf32> to vector<1x8x256xf32>
    %cst_18 = arith.constant dense<0.000000e+00> : vector<1xf32>
    %54 = vector.multi_reduction <add>, %53, %cst_18 [1, 2] : vector<1x8x256xf32> to vector<1xf32>
    %55 = vector.shape_cast %54 : vector<1xf32> to vector<1x1x1xf32>
    %56 = vector.extract %55[0, 0, 0] : f32 from vector<1x1x1xf32>
    %57 = vector.broadcast %56 : f32 to vector<1x8x128xf32>
    %c0_19 = arith.constant 0 : index
    %c0_20 = arith.constant 0 : index
    %c0_21 = arith.constant 0 : index
    %58 = vector.load %arg4[%c0_19, %c0_20, %c0_21] : memref<1x8x128xf32, #tpu.memory_space<vmem>>, vector<1x8x128xf32>
    tpu.vector_store %arg4[%c0_19, %c0_20, %c0_21], %57 {strides = array<i32>} : memref<1x8x128xf32, #tpu.memory_space<vmem>>, vector<1x8x128xf32>,
    return
  }
  func.func @transform_0(%arg0: i32) -> (i32, i32) {
    %c0_i32 = arith.constant 0 : i32
    %c0_i32_0 = arith.constant 0 : i32
    %c0_i32_1 = arith.constant 0 : i32
    return %c0_i32, %c0_i32_0 : i32, i32
  }
  func.func @transform_1(%arg0: i32) -> (i32, i32) {
    %c0_i32 = arith.constant 0 : i32
    %c0_i32_0 = arith.constant 0 : i32
    %c0_i32_1 = arith.constant 0 : i32
    return %c0_i32, %c0_i32_0 : i32, i32
  }
  func.func @transform_2(%arg0: i32) -> (i32, i32) {
    %c0_i32 = arith.constant 0 : i32
    %c0_i32_0 = arith.constant 0 : i32
    return %arg0, %c0_i32 : i32, i32
  }
  func.func @transform_3(%arg0: i32) -> (i32, i32, i32) {
    %c0_i32 = arith.constant 0 : i32
    %c0_i32_0 = arith.constant 0 : i32
    %c0_i32_1 = arith.constant 0 : i32
    return %arg0, %c0_i32, %c0_i32_0 : i32, i32, i32
  }
}

</mosaic_0001>

<llo_original>
// kernel: tpu_custom_call.1
$region0: #{tpu_custom_call.1}
  #allocation0 [shape = 'u32[]', space=smem, size = 0x4, offset = 0x4, fixed_abs, tag = 'smem constant byte address 0x4 - core index']
  #allocation1 [shape = 'u32[144,128]{1,0:T(1,128)}', space=vmem, size = 0x12000, scoped, tag = 'internal scratch']
  %s0 = inlined_call_operand.hbm [shape: f32[1,256], index: 0, kind: input, shape index: {}]
  %s1 = inlined_call_operand.hbm [shape: f32[1,256], index: 1, kind: input, shape index: {}]
  %s2 = inlined_call_operand.hbm [shape: f32[8,256], index: 2, kind: input, shape index: {}]
  %s3 = inlined_call_operand.hbm [shape: f32[1,8,128], index: 3, kind: output, shape index: {}]
  %s4 = sld [smem:[#allocation0]]
  $region34: #{tpu_custom_call.1} parent=0
    _
  %s6 = ssub.s32 1, %s4
  %s7 = scalar_select 0, %s6, %s4
  $region1: #{tpu_custom_call.1} parent=0
    #allocation2 [shape = 'u8[1024]{0}', space=vmem, size = 0x400, scoped, tag = 'input window, operand 0, single buffered']
    #allocation3 [shape = 's32[1]{0}', space=sflag, size = 0x4, scoped, tag = 'scoped memory for tpu_custom_call.1']
    #allocation4 [shape = 's32[1]{0}', space=sflag, size = 0x4, scoped, tag = 'scoped memory for tpu_custom_call.1']
    #allocation5 [shape = 'u8[1024]{0}', space=vmem, size = 0x400, scoped, tag = 'input window, operand 1, single buffered']
    #allocation6 [shape = 's32[1]{0}', space=sflag, size = 0x4, scoped, tag = 'scoped memory for tpu_custom_call.1']
    #allocation7 [shape = 'u8[8192]{0}', space=vmem, size = 0x2000, scoped, tag = 'input window, operand 2, single buffered']
    #allocation8 [shape = 'u8[4096]{0}', space=vmem, size = 0x1000, scoped, tag = 'output window, operand 0, single buffered']
    %8 = vsyncpa [#allocation3], 0
    %9 = vsyncpa [#allocation6], 0
    %10 = vsyncpa [#allocation4], 0
    // Predicated region
    $region2: #{tpu_custom_call.1} parent=1 // pred_check
      _
    $region3: #{tpu_custom_call.1} parent=1 // pred_check_branch
      %12 = sbr.rel (0) target = $region5
    $region4: #{tpu_custom_call.1} parent=1 // pred_region
      %s14 = ssub.s32 32, 32
      %15 = vsyncadd [#allocation3], %s14
      %s17 = sshll.u32 [#allocation2], 4
      %s18 = int_to_ptr.vmem [resolvable:$true] %s17
      %20 = dma.hbm_to_vmem [thread:$0]  %s0, 32, %s18, [#allocation3]
    $region5: #{tpu_custom_call.1} parent=1 // pred_fallthru
      _
    // Predicated region
    $region6: #{tpu_custom_call.1} parent=1 // pred_check
      _
    $region7: #{tpu_custom_call.1} parent=1 // pred_check_branch
      %22 = sbr.rel (0) target = $region9
    $region8: #{tpu_custom_call.1} parent=1 // pred_region
      %s24 = ssub.s32 32, 32
      %25 = vsyncadd [#allocation6], %s24
      %s27 = sshll.u32 [#allocation5], 4
      %s28 = int_to_ptr.vmem [resolvable:$true] %s27
      %30 = dma.hbm_to_vmem [thread:$0]  %s1, 32, %s28, [#allocation6]
    $region9: #{tpu_custom_call.1} parent=1 // pred_fallthru
      _
    // Predicated region
    $region10: #{tpu_custom_call.1} parent=1 // pred_check
      _
    $region11: #{tpu_custom_call.1} parent=1 // pred_check_branch
      %32 = sbr.rel (0) target = $region13
    $region12: #{tpu_custom_call.1} parent=1 // pred_region
      %s34 = ssub.s32 256, 256
      %35 = vsyncadd [#allocation6], %s34
      %s37 = sshll.u32 [#allocation7], 4
      %s38 = int_to_ptr.vmem [resolvable:$true] %s37
      %40 = dma.hbm_to_vmem [thread:$0]  %s2, 256, %s38, [#allocation6]
    $region13: #{tpu_custom_call.1} parent=1 // pred_fallthru
      _
    // Predicated region
    $region14: #{tpu_custom_call.1} parent=1 // pred_check
      _
    $region15: #{tpu_custom_call.1} parent=1 // pred_check_branch
      %42 = sbr.rel (0) target = $region17
    $region16: #{tpu_custom_call.1} parent=1 // pred_region
      %43 = dma.done [#allocation3], 32
    $region17: #{tpu_custom_call.1} parent=1 // pred_fallthru
      _
    // Predicated region
    $region18: #{tpu_custom_call.1} parent=1 // pred_check
      _
    $region19: #{tpu_custom_call.1} parent=1 // pred_check_branch
      %45 = sbr.rel (0) target = $region21
    $region20: #{tpu_custom_call.1} parent=1 // pred_region
      %46 = dma.done [#allocation6], 32
    $region21: #{tpu_custom_call.1} parent=1 // pred_fallthru
      _
    // Predicated region
    $region22: #{tpu_custom_call.1} parent=1 // pred_check
      _
    $region23: #{tpu_custom_call.1} parent=1 // pred_check_branch
      %48 = sbr.rel (0) target = $region25
    $region24: #{tpu_custom_call.1} parent=1 // pred_region
      %49 = dma.done [#allocation6], 256
    $region25: #{tpu_custom_call.1} parent=1 // pred_fallthru
      _
    %v50 = vld [vmem:[#allocation7] sm:$0xff]
    %v51 = vld [vmem:[#allocation7 + $0x8] sm:$0xff]
    %v52 = vld [vmem:[#allocation2] sm:$0x3]
    %v53 = vld [vmem:[#allocation5] sm:$0x3]
    %vm54 = vcmp.lt.f32.partialorder %v50, 0.014512472
    %vm55 = vcmp.lt.f32.partialorder %v51, 0.014512472
    %v56 = vsel %vm54, 1, 0
    %v57 = vsel %vm55, 1, 0
    %v58 = vcvt.s32.f32 %v56
    %v59 = vcvt.s32.f32 %v57
    %60 = vrot.lane.b32.xlu0 %v58, 1
    %v61 = vpop.permute.xlu0 %60
    %62 = vrot.lane.b32.xlu0 %v59, 1
    %v63 = vpop.permute.xlu0 %62
    %v64 = vlaneseq
    %v65 = vand.u32 %v64, 127
    %vm66 = vcmp.lt.s32.totalorder %v65, 1
    %v67 = vsel %vm66, %v61, %v63
    %v68 = vsel %vm66, %v63, %v61
    %v70 = vlaneseq
    %v71 = vshrl.u32 %v70, 7
    %v72 = vsub.s32 0, %v71
    %v73 = vrot.slane %v52, %v72
    %v74 = vlaneseq
    %v75 = vshrl.u32 %v74, 7
    %v76 = vsub.s32 1, %v75
    %v77 = vrot.slane %v52, %v76
    %80 = vrot.lane.b32.xlu0 %v73, 1
    %v81 = vpop.permute.xlu0 %80
    %82 = vrot.lane.b32.xlu0 %v77, 1
    %v83 = vpop.permute.xlu0 %82
    %v84 = vsel %vm66, %v81, %v83
    %v85 = vsel %vm66, %v83, %v81
    %v86 = vsub.f32 %v85, %v73
    %v87 = vsub.f32 %v84, %v77
    %v88 = vand.u32 2147483647, %v86
    %v89 = vand.u32 2147483647, %v87
    %vm90 = vcmp.eq.f32.partialorder %v88, 1.0
    %vm91 = vcmp.eq.f32.partialorder %v89, 1.0
    %v92 = vsel %vm90, 1, 0
    %v93 = vsel %vm91, 1, 0
    %v94 = vlaneseq
    %v95 = vshrl.u32 %v94, 7
    %v96 = vsub.s32 0, %v95
    %v97 = vrot.slane %v92, %v96
    %v98 = vlaneseq
    %v99 = vshrl.u32 %v98, 7
    %v100 = vsub.s32 0, %v99
    %v101 = vrot.slane %v93, %v100
    %vm102 = vcmp.eq.s32.totalorder %v97, 1
    %vm103 = vcmp.eq.s32.totalorder %v101, 1
    %v104 = vsel %vm102, %v68, 0.0
    %v105 = vsel %vm103, %v67, 0.0
    %v106 = vmax.f32 %v58, %v104
    %v107 = vmax.f32 %v59, %v105
    %108 = vrot.lane.b32.xlu0 %v58, 127
    %v109 = vpop.permute.xlu0 %108
    %110 = vrot.lane.b32.xlu0 %v59, 127
    %v111 = vpop.permute.xlu0 %110
    %vm112 = vcmp.lt.s32.totalorder %v65, 127
    %v113 = vsel %vm112, %v109, %v111
    %v114 = vsel %vm112, %v111, %v109
    %115 = vrot.lane.b32.xlu0 %v73, 127
    %v116 = vpop.permute.xlu0 %115
    %117 = vrot.lane.b32.xlu0 %v77, 127
    %v118 = vpop.permute.xlu0 %117
    %v119 = vsel %vm112, %v116, %v118
    %v120 = vsel %vm112, %v118, %v116
    %v121 = vsub.f32 %v119, %v73
    %v122 = vsub.f32 %v120, %v77
    %v123 = vand.u32 2147483647, %v121
    %v124 = vand.u32 2147483647, %v122
    %vm125 = vcmp.eq.f32.partialorder %v123, 1.0
    %vm126 = vcmp.eq.f32.partialorder %v124, 1.0
    %v127 = vsel %vm125, 1, 0
    %v128 = vsel %vm126, 1, 0
    %v129 = vlaneseq
    %v130 = vshrl.u32 %v129, 7
    %v131 = vsub.s32 0, %v130
    %v132 = vrot.slane %v127, %v131
    %v133 = vlaneseq
    %v134 = vshrl.u32 %v133, 7
    %v135 = vsub.s32 0, %v134
    %v136 = vrot.slane %v128, %v135
    %vm137 = vcmp.eq.s32.totalorder %v132, 1
    %vm138 = vcmp.eq.s32.totalorder %v136, 1
    %v139 = vsel %vm137, %v113, 0.0
    %v140 = vsel %vm138, %v114, 0.0
    %v141 = vmax.f32 %v106, %v139
    %v142 = vmax.f32 %v107, %v140
    %143 = vrot.lane.b32.xlu0 %v141, 16
    %v144 = vpop.permute.xlu0 %143
    %145 = vrot.lane.b32.xlu0 %v142, 16
    %v146 = vpop.permute.xlu0 %145
    %vm147 = vcmp.lt.s32.totalorder %v65, 16
    %v148 = vsel %vm147, %v144, %v146
    %v149 = vsel %vm147, %v146, %v144
    %v151 = vlaneseq
    %v152 = vshrl.u32 %v151, 7
    %v153 = vsub.s32 0, %v152
    %v154 = vrot.slane %v53, %v153
    %v155 = vlaneseq
    %v156 = vshrl.u32 %v155, 7
    %v157 = vsub.s32 1, %v156
    %v158 = vrot.slane %v53, %v157
    %161 = vrot.lane.b32.xlu0 %v154, 16
    %v162 = vpop.permute.xlu0 %161
    %163 = vrot.lane.b32.xlu0 %v158, 16
    %v164 = vpop.permute.xlu0 %163
    %v165 = vsel %vm147, %v162, %v164
    %v166 = vsel %vm147, %v164, %v162
    %v167 = vsub.f32 %v166, %v154
    %v168 = vsub.f32 %v165, %v158
    %v169 = vand.u32 2147483647, %v167
    %v170 = vand.u32 2147483647, %v168
    %vm171 = vcmp.eq.f32.partialorder %v169, 1.0
    %vm172 = vcmp.eq.f32.partialorder %v170, 1.0
    %v173 = vsel %vm171, 1, 0
    %v174 = vsel %vm172, 1, 0
    %v175 = vlaneseq
    %v176 = vshrl.u32 %v175, 7
    %v177 = vsub.s32 0, %v176
    %v178 = vrot.slane %v173, %v177
    %v179 = vlaneseq
    %v180 = vshrl.u32 %v179, 7
    %v181 = vsub.s32 0, %v180
    %v182 = vrot.slane %v174, %v181
    %vm183 = vcmp.eq.s32.totalorder %v178, 1
    %vm184 = vcmp.eq.s32.totalorder %v182, 1
    %v185 = vsel %vm183, %v149, 0.0
    %v186 = vsel %vm184, %v148, 0.0
    %v187 = vmax.f32 %v141, %v185
    %v188 = vmax.f32 %v142, %v186
    %189 = vrot.lane.b32.xlu0 %v141, 112
    %v190 = vpop.permute.xlu0 %189
    %191 = vrot.lane.b32.xlu0 %v142, 112
    %v192 = vpop.permute.xlu0 %191
    %vm193 = vcmp.lt.s32.totalorder %v65, 112
    %v194 = vsel %vm193, %v190, %v192
    %v195 = vsel %vm193, %v192, %v190
    %196 = vrot.lane.b32.xlu0 %v154, 112
    %v197 = vpop.permute.xlu0 %196
    %198 = vrot.lane.b32.xlu0 %v158, 112
    %v199 = vpop.permute.xlu0 %198
    %v200 = vsel %vm193, %v197, %v199
    %v201 = vsel %vm193, %v199, %v197
    %v202 = vsub.f32 %v200, %v154
    %v203 = vsub.f32 %v201, %v158
    %v204 = vand.u32 2147483647, %v202
    %v205 = vand.u32 2147483647, %v203
    %vm206 = vcmp.eq.f32.partialorder %v204, 1.0
    %vm207 = vcmp.eq.f32.partialorder %v205, 1.0
    %v208 = vsel %vm206, 1, 0
    %v209 = vsel %vm207, 1, 0
    %v210 = vlaneseq
    %v211 = vshrl.u32 %v210, 7
    %v212 = vsub.s32 0, %v211
    %v213 = vrot.slane %v208, %v212
    %v214 = vlaneseq
    %v215 = vshrl.u32 %v214, 7
    %v216 = vsub.s32 0, %v215
    %v217 = vrot.slane %v209, %v216
    %vm218 = vcmp.eq.s32.totalorder %v213, 1
    %vm219 = vcmp.eq.s32.totalorder %v217, 1
    %v220 = vsel %vm218, %v194, 0.0
    %v221 = vsel %vm219, %v195, 0.0
    %v222 = vmax.f32 %v187, %v220
    %v223 = vmax.f32 %v188, %v221
    %v224 = vsub.f32 1.0, %v222
    %v225 = vsub.f32 1.0, %v223
    %v226 = vadd.f32 %v224, %v225
    %227 = vadd.xlane.f32.xlu0 %v226
    %v228 = vpop.xlane.xlu0 %227
    %v229 = vrot.slane %v228, 4
    %v230 = vadd.f32 %v228, %v229
    %v231 = vrot.slane %v230, 2
    %v232 = vadd.f32 %v230, %v231
    %v233 = vrot.slane %v232, 1
    %v234 = vadd.f32 %v232, %v233
    %s235 = vtos %v234
    %v236 = vstv %s235
    %237 = vst [vmem:[#allocation8] sm:$0xff] %v236
    // Predicated region
    $region26: #{tpu_custom_call.1} parent=1 // pred_check
      _
    $region27: #{tpu_custom_call.1} parent=1 // pred_check_branch
      %239 = sbr.rel (0) target = $region29
    $region28: #{tpu_custom_call.1} parent=1 // pred_region
      %s241 = ssub.s32 128, 128
      %242 = vsyncadd [#allocation4], %s241
      %s244 = sshll.u32 [#allocation8], 4
      %s245 = int_to_ptr.vmem [resolvable:$true] %s244
      %247 = dma.vmem_to_hbm [thread:$0]  %s245, 128, %s3, [#allocation4]
    $region29: #{tpu_custom_call.1} parent=1 // pred_fallthru
      _
    // Predicated region
    $region30: #{tpu_custom_call.1} parent=1 // pred_check
      _
    $region31: #{tpu_custom_call.1} parent=1 // pred_check_branch
      %249 = sbr.rel (0) target = $region33
    $region32: #{tpu_custom_call.1} parent=1 // pred_region
      %250 = dma.done [#allocation4], 128
    $region33: #{tpu_custom_call.1} parent=1 // pred_fallthru
      _
    %251 = vsyncpa [#allocation3], 1
    %252 = vsyncpa [#allocation6], 1
    %253 = vsyncpa [#allocation4], 1

</llo_original>
